<compile_context>
chip_gen: v6e
topology: v6e:2x2x1
jax: 0.10.0
libtpu: 0.0.40
codegen_flags: <defaults>
</compile_context>

<pallas_src>
import functools
import math

import jax
import jax.numpy as jnp
from jax.experimental import pallas as pl
from jax.experimental.pallas import tpu as pltpu


def _label_smoothing_kernel(x_ref, tgt_ref, out_ref, *,
                            v, padding_idx, confidence, smooth_val,
                            col_ragged, fold_pad_col, pad_block):
    j = pl.program_id(1)          # vocab-block index (reduction axis, last)

    # Per-row-block accumulator: the (1, 8, 128) output block keeps the same
    # block index for every j, so it stays resident in VMEM across the
    # reduction axis; zero it on the first vocab block.
    @pl.when(j == 0)
    def _():
        out_ref[...] = jnp.zeros_like(out_ref)

    x = x_ref[...].astype(jnp.float32)          # (tn, tv) log-probs
    tgt = tgt_ref[...]                          # (tn, 1) int32
    tn, tv = x.shape

    lane = jax.lax.broadcasted_iota(jnp.int32, (tn, tv), 1)   # local column idx

    if col_ragged:
        # The last vocab block overruns the array; the out-of-bounds part of
        # the VMEM buffer may hold garbage (possibly NaN/Inf), so mask x
        # itself, not just the weights.  (Choose block_v | vocab to skip this.)
        x = jnp.where(lane < (v - j * tv), x, 0.0)

    # weight = confidence at the target column, smooth_val elsewhere.  The
    # padding column is NOT zeroed in the hot per-element chain; it is either
    # folded in (single vocab block) or corrected once per row block below.
    w = jnp.where(lane == (tgt - j * tv), confidence, smooth_val)
    if fold_pad_col:
        w = jnp.where(lane == padding_idx, 0.0, w)

    row_valid = tgt != padding_idx              # (tn,1); padded/OOB rows False

    # Cross term -sum t*x: reduce lanes per row, kill padding rows (this also
    # discards any NaN/Inf coming from garbage out-of-bounds rows), collapse to
    # a scalar and accumulate into the resident output block (all 1024 slots
    # hold the same running value -> one unmasked vreg RMW per grid step and a
    # lane-dense HBM writeback once per row block).
    row = jnp.sum(w * x, axis=1, keepdims=True)
    row = jnp.where(row_valid, row, 0.0)
    out_ref[...] = out_ref[...] - jnp.sum(row)

    if not fold_pad_col:
        # true_dist[:, padding_idx] = 0: the hot path charged smooth_val at the
        # padding column, add that contribution back.  Runs only for the single
        # vocab block that contains padding_idx (once per row block).
        @pl.when(j == pad_block)
        def _():
            pc = lane == (padding_idx % tv)
            corr = jnp.sum(jnp.where(pc & row_valid, x, 0.0))
            out_ref[...] = out_ref[...] + smooth_val * corr


def _round_up(a, m):
    return ((a + m - 1) // m) * m


def label_smoothing_loss(x, target, *, size, padding_idx, smoothing=0.0,
                         block_n=512, block_v=4096):
    """x: (N, size) float log-probabilities, target: (N,) int labels -> scalar.

    Defaults give an 8 MiB f32 x tile (512 x 4096); double-buffered that is
    16 MiB, within the explicit 32 MiB scoped-VMEM limit set below (fine on
    v5e/v6e physical 128 MiB and v7x physical 64 MiB).  On v5e, 4 MiB tiles
    (block_v=2048) also stay under the 16 MiB scoped default if preferred.
    """
    assert x.shape[1] == size
    assert block_n % 8 == 0 and block_v % 128 == 0
    n, v = x.shape

    confidence = 1.0 - smoothing
    smooth_val = smoothing / (size - 2)
    # sum_c t*log(t) per non-padding row is a trace-time constant
    # (0*log(0) := 0); it is added in the wrapper, not the kernel.
    entropy_per_row = 0.0
    if confidence > 0.0:
        entropy_per_row += confidence * math.log(confidence)
    if smooth_val > 0.0:
        entropy_per_row += (size - 2) * smooth_val * math.log(smooth_val)

    tn = min(block_n, _round_up(n, 8))
    tv = min(block_v, _round_up(v, 128))
    grid_n = -(-n // tn)
    grid_v = -(-v // tv)

    # x is streamed unpadded (no full-copy jnp.pad); ragged row/column tails
    # are handled in-kernel.  Only the tiny target vector is padded so its
    # blocks never overrun (padded rows look like padding rows -> contribute 0).
    tgt = target.astype(jnp.int32)
    n_tgt = grid_n * tn
    if n_tgt != n:
        tgt = jnp.pad(tgt, (0, n_tgt - n), constant_values=padding_idx)
    tgt2d = tgt.reshape(n_tgt, 1)

    kernel = functools.partial(
        _label_smoothing_kernel,
        v=v, padding_idx=padding_idx, confidence=confidence,
        smooth_val=smooth_val,
        col_ragged=(v % tv != 0),
        fold_pad_col=(grid_v == 1),
        pad_block=padding_idx // tv)

    # One lane-dense (8, 128) partial-sum slab per row block: lets the row axis
    # be "parallel" (v7x megacore) with no shared accumulator and keeps the
    # output writeback unmasked.  The wrapper sums the per-row-block partials.
    out = pl.pallas_call(
        kernel,
        out_shape=jax.ShapeDtypeStruct((grid_n, 8, 128), jnp.float32),
        grid_spec=pltpu.PrefetchScalarGridSpec(
            num_scalar_prefetch=0,
            grid=(grid_n, grid_v),
            in_specs=[
                pl.BlockSpec((tn, tv), lambda i, j: (i, j)),
                pl.BlockSpec((tn, 1), lambda i, j: (i, 0)),
            ],
            out_specs=pl.BlockSpec((1, 8, 128), lambda i, j: (i, 0, 0)),
        ),
        compiler_params=pltpu.CompilerParams(
            dimension_semantics=("parallel", "arbitrary"),
            vmem_limit_bytes=32 * 1024 * 1024),
        cost_estimate=pl.CostEstimate(
            flops=5 * n * v,
            transcendentals=0,
            bytes_accessed=4 * n * v + 4 * n_tgt + 4 * grid_n * 8 * 128),
    )(x, tgt2d)

    cross = jnp.sum(out[:, 0, 0])
    n_valid = jnp.sum((target != padding_idx).astype(jnp.float32))
    # TODO(synk): the PyTorch module also stashes the dense `self.true_dist`;
    # it is intentionally never materialized here (loss only).
    return cross + n_valid * entropy_per_row


def _reference(x, target, *, size, padding_idx, smoothing):
    confidence = 1.0 - smoothing
    n, v = x.shape
    col = jnp.arange(v)[None, :]
    tgt = target[:, None]
    td = jnp.full((n, v), smoothing / (size - 2), jnp.float32)
    td = jnp.where(col == tgt, confidence, td)
    td = jnp.where(col == padding_idx, 0.0, td)
    td = jnp.where(tgt == padding_idx, 0.0, td)
    term = jnp.where(td > 0, td * (jnp.log(jnp.where(td > 0, td, 1.0)) - x), 0.0)
    return jnp.sum(term)


if __name__ == "__main__":
    key = jax.random.PRNGKey(0)
    kx, kt = jax.random.split(key)

    # Small but non-trivial: 20 tokens, 300 classes -> ragged row tail (20 % 8)
    # and ragged vocab tail (300 % 128), exercising the unpadded-x path.
    N, V = 20, 300
    padding_idx = 0
    smoothing = 0.4

    logits = jax.random.normal(kx, (N, V), dtype=jnp.float32)
    x = jax.nn.log_softmax(logits, axis=-1)          # KLDivLoss expects log-probs
    target = jax.random.randint(kt, (N,), 0, V, dtype=jnp.int32)
    # make a couple of rows padding to exercise the row-zeroing path
    target = target.at[3].set(padding_idx).at[7].set(padding_idx)

    ref = _reference(x, target, size=V, padding_idx=padding_idx,
                     smoothing=smoothing)

    # Multi-block path: 3x3 grid, ragged row+column tails, padding-column
    # correction via pl.when, per-row-block lane-dense partials.
    loss1 = label_smoothing_loss(x, target, size=V, padding_idx=padding_idx,
                                 smoothing=smoothing, block_n=8, block_v=128)
    loss1 = jax.block_until_ready(loss1)
    assert jnp.allclose(loss1, ref, rtol=1e-4, atol=1e-3), (loss1, ref)

    # Default big tiles clamp to the array -> single (1,1) grid point, exercises
    # the fold_pad_col fast path and the ragged column/row masking.
    loss2 = label_smoothing_loss(x, target, size=V, padding_idx=padding_idx,
                                 smoothing=smoothing)
    loss2 = jax.block_until_ready(loss2)
    assert jnp.allclose(loss2, ref, rtol=1e-4, atol=1e-3), (loss2, ref)

    print("KERNEL_OK")
</pallas_src>

<mosaic_0001>
module attributes {stable_mosaic.version = 11 : i64} {
  func.func @_label_smoothing_kernel(%arg0: i32, %arg1: i32, %arg2: memref<8x128xf32, #tpu.memory_space<vmem>>, %arg3: memref<8x1xi32, #tpu.memory_space<vmem>>, %arg4: memref<1x8x128xf32, #tpu.memory_space<vmem>>) attributes {dimension_semantics = [#tpu.dimension_semantics<parallel>, #tpu.dimension_semantics<arbitrary>], iteration_bounds = array<i64: 3, 3>, scalar_prefetch = 0 : i64, scratch_operands = 0 : i64, tpu.core_type = #tpu.core_type<tc>, window_params = [{transform_indices = @transform_0, window_bounds = array<i64: 8, 128>}, {transform_indices = @transform_1, window_bounds = array<i64: 8, 1>}, {transform_indices = @transform_2, window_bounds = array<i64: 1, 8, 128>}]} {
    %c0_i32 = arith.constant 0 : i32
    %0 = arith.cmpi eq, %arg1, %c0_i32 : i32
    %1 = arith.extui %0 : i1 to i32
    %c0_i32_0 = arith.constant 0 : i32
    %2 = arith.cmpi ne, %1, %c0_i32_0 : i32
    scf.if %2 {
      %cst_19 = arith.constant 0.000000e+00 : f32
      %38 = vector.broadcast %cst_19 : f32 to vector<1x8x128xf32>
      %c0_20 = arith.constant 0 : index
      %c0_21 = arith.constant 0 : index
      %c0_22 = arith.constant 0 : index
      %39 = vector.load %arg4[%c0_20, %c0_21, %c0_22] : memref<1x8x128xf32, #tpu.memory_space<vmem>>, vector<1x8x128xf32>
      tpu.vector_store %arg4[%c0_20, %c0_21, %c0_22], %38 {strides = array<i32>} : memref<1x8x128xf32, #tpu.memory_space<vmem>>, vector<1x8x128xf32>,
    } else {
    }
    %c0 = arith.constant 0 : index
    %c0_1 = arith.constant 0 : index
    %3 = vector.load %arg2[%c0, %c0_1] : memref<8x128xf32, #tpu.memory_space<vmem>>, vector<8x128xf32>
    %c0_2 = arith.constant 0 : index
    %c0_3 = arith.constant 0 : index
    %4 = vector.load %arg3[%c0_2, %c0_3] : memref<8x1xi32, #tpu.memory_space<vmem>>, vector<8x1xi32>
    %5 = tpu.iota {dimensions = array<i32: 1>} : vector<8x128xi32>
    %c128_i32 = arith.constant 128 : i32
    %6 = arith.muli %arg1, %c128_i32 : i32
    %c300_i32 = arith.constant 300 : i32
    %7 = arith.subi %c300_i32, %6 : i32
    %8 = vector.broadcast %7 : i32 to vector<8x128xi32>
    %9 = arith.cmpi slt, %5, %8 : vector<8x128xi32>
    %cst = arith.constant 0.000000e+00 : f32
    %10 = vector.broadcast %cst : f32 to vector<8x128xf32>
    %11 = arith.select %9, %3, %10 : vector<8x128xi1>, vector<8x128xf32>
    %c128_i32_4 = arith.constant 128 : i32
    %12 = arith.muli %arg1, %c128_i32_4 : i32
    %13 = vector.broadcast %12 : i32 to vector<8x1xi32>
    %14 = arith.subi %4, %13 : vector<8x1xi32>
    %15 = vector.broadcast %14 : vector<8x1xi32> to vector<8x128xi32>
    %16 = arith.cmpi eq, %5, %15 : vector<8x128xi32>
    %cst_5 = arith.constant 6.000000e-01 : f32
    %cst_6 = arith.constant 0.00134228193 : f32
    %17 = vector.broadcast %cst_5 : f32 to vector<8x128xf32>
    %18 = vector.broadcast %cst_6 : f32 to vector<8x128xf32>
    %19 = arith.select %16, %17, %18 : vector<8x128xi1>, vector<8x128xf32>
    %c0_i32_7 = arith.constant 0 : i32
    %20 = vector.broadcast %c0_i32_7 : i32 to vector<8x1xi32>
    %21 = arith.cmpi ne, %4, %20 : vector<8x1xi32>
    %22 = arith.mulf %19, %11 : vector<8x128xf32>
    %cst_8 = arith.constant dense<0.000000e+00> : vector<8xf32>
    %23 = vector.multi_reduction <add>, %22, %cst_8 [1] : vector<8x128xf32> to vector<8xf32>
    %24 = vector.shape_cast %23 : vector<8xf32> to vector<8x1xf32>
    %cst_9 = arith.constant 0.000000e+00 : f32
    %25 = vector.broadcast %cst_9 : f32 to vector<8x1xf32>
    %26 = arith.select %21, %24, %25 : vector<8x1xi1>, vector<8x1xf32>
    %c0_10 = arith.constant 0 : index
    %c0_11 = arith.constant 0 : index
    %c0_12 = arith.constant 0 : index
    %27 = vector.load %arg4[%c0_10, %c0_11, %c0_12] : memref<1x8x128xf32, #tpu.memory_space<vmem>>, vector<1x8x128xf32>
    %28 = vector.shape_cast %26 : vector<8x1xf32> to vector<1x8x1xf32>
    %cst_13 = arith.constant dense<0.000000e+00> : vector<1xf32>
    %29 = vector.multi_reduction <add>, %28, %cst_13 [1, 2] : vector<1x8x1xf32> to vector<1xf32>
    %30 = vector.shape_cast %29 : vector<1xf32> to vector<1x1x1xf32>
    %31 = vector.extract %30[0, 0, 0] : f32 from vector<1x1x1xf32>
    %32 = vector.broadcast %31 : f32 to vector<1x8x128xf32>
    %33 = arith.subf %27, %32 : vector<1x8x128xf32>
    %c0_14 = arith.constant 0 : index
    %c0_15 = arith.constant 0 : index
    %c0_16 = arith.constant 0 : index
    %34 = vector.load %arg4[%c0_14, %c0_15, %c0_16] : memref<1x8x128xf32, #tpu.memory_space<vmem>>, vector<1x8x128xf32>
    tpu.vector_store %arg4[%c0_14, %c0_15, %c0_16], %33 {strides = array<i32>} : memref<1x8x128xf32, #tpu.memory_space<vmem>>, vector<1x8x128xf32>,
    %c0_i32_17 = arith.constant 0 : i32
    %35 = arith.cmpi eq, %arg1, %c0_i32_17 : i32
    %36 = arith.extui %35 : i1 to i32
    %c0_i32_18 = arith.constant 0 : i32
    %37 = arith.cmpi ne, %36, %c0_i32_18 : i32
    scf.if %37 {
      %c0_i32_19 = arith.constant 0 : i32
      %38 = vector.broadcast %c0_i32_19 : i32 to vector<8x128xi32>
      %39 = arith.cmpi eq, %5, %38 : vector<8x128xi32>
      %40 = vector.broadcast %21 : vector<8x1xi1> to vector<8x128xi1>
      %41 = arith.andi %39, %40 : vector<8x128xi1>
      %cst_20 = arith.constant 0.000000e+00 : f32
      %42 = vector.broadcast %cst_20 : f32 to vector<8x128xf32>
      %43 = arith.select %41, %11, %42 : vector<8x128xi1>, vector<8x128xf32>
      %44 = vector.shape_cast %43 : vector<8x128xf32> to vector<1x8x128xf32>
      %cst_21 = arith.constant dense<0.000000e+00> : vector<1xf32>
      %45 = vector.multi_reduction <add>, %44, %cst_21 [1, 2] : vector<1x8x128xf32> to vector<1xf32>
      %46 = vector.shape_cast %45 : vector<1xf32> to vector<1x1x1xf32>
      %47 = vector.extract %46[0, 0, 0] : f32 from vector<1x1x1xf32>
      %c0_22 = arith.constant 0 : index
      %c0_23 = arith.constant 0 : index
      %c0_24 = arith.constant 0 : index
      %48 = vector.load %arg4[%c0_22, %c0_23, %c0_24] : memref<1x8x128xf32, #tpu.memory_space<vmem>>, vector<1x8x128xf32>
      %cst_25 = arith.constant 0.00134228193 : f32
      %49 = arith.mulf %cst_25, %47 : f32
      %50 = vector.broadcast %49 : f32 to vector<1x8x128xf32>
      %51 = arith.addf %48, %50 : vector<1x8x128xf32>
      %c0_26 = arith.constant 0 : index
      %c0_27 = arith.constant 0 : index
      %c0_28 = arith.constant 0 : index
      %52 = vector.load %arg4[%c0_26, %c0_27, %c0_28] : memref<1x8x128xf32, #tpu.memory_space<vmem>>, vector<1x8x128xf32>
      tpu.vector_store %arg4[%c0_26, %c0_27, %c0_28], %51 {strides = array<i32>} : memref<1x8x128xf32, #tpu.memory_space<vmem>>, vector<1x8x128xf32>,
    } else {
    }
    return
  }
  func.func @transform_0(%arg0: i32, %arg1: i32) -> (i32, i32) {
    %c0_i32 = arith.constant 0 : i32
    return %arg0, %arg1 : i32, i32
  }
  func.func @transform_1(%arg0: i32, %arg1: i32) -> (i32, i32) {
    %c0_i32 = arith.constant 0 : i32
    %c0_i32_0 = arith.constant 0 : i32
    return %arg0, %c0_i32 : i32, i32
  }
  func.func @transform_2(%arg0: i32, %arg1: i32) -> (i32, i32, i32) {
    %c0_i32 = arith.constant 0 : i32
    %c0_i32_0 = arith.constant 0 : i32
    %c0_i32_1 = arith.constant 0 : i32
    return %arg0, %c0_i32, %c0_i32_0 : i32, i32, i32
  }
}

</mosaic_0001>

<llo_original>
// kernel: tpu_custom_call.1
$region0: #{tpu_custom_call.1}
  #allocation0 [shape = 'u32[]', space=smem, size = 0x4, offset = 0x4, fixed_abs, tag = 'smem constant byte address 0x4 - core index']
  #allocation1 [shape = 'u32[144,128]{1,0:T(1,128)}', space=vmem, size = 0x12000, scoped, tag = 'internal scratch']
  %s0 = inlined_call_operand.hbm [shape: f32[20,300], index: 0, kind: input, shape index: {}]
  %s1 = inlined_call_operand.vmem [shape: s32[24,1], index: 1, kind: input, shape index: {}]
  %s2 = inlined_call_operand.hbm [shape: f32[3,8,128], index: 2, kind: output, shape index: {}]
  %s3 = sld [smem:[#allocation0]]
  $region53: #{tpu_custom_call.1} parent=0
    _
  %s5 = ssub.s32 1, %s3
  %s6 = scalar_select 0, %s5, %s3
  $region1: #{tpu_custom_call.1} parent=0
    #allocation2 [shape = 'u8[8192]{0}', space=vmem, size = 0x2000, scoped, tag = 'input window, operand 0']
    #allocation3 [shape = 's32[2]{0}', space=sflag, size = 0x8, scoped, tag = 'scoped memory for tpu_custom_call.1']
    #allocation4 [shape = 's32[2]{0}', space=sflag, size = 0x8, scoped, tag = 'scoped memory for tpu_custom_call.1']
    #allocation5 [shape = 'u8[8192]{0}', space=vmem, size = 0x2000, scoped, tag = 'output window, operand 0']
    %7 = vsyncpa [#allocation3], 0
    %s8 = scalar_lea.sflag [#allocation3], 1
    %9 = vsyncpa %s8, 0
    %10 = vsyncpa [#allocation4], 0
    %s11 = scalar_lea.sflag [#allocation4], 1
    %12 = vsyncpa %s11, 0
    loop: start=0, step=1, limit=11
    $region2: #{tpu_custom_call.1} parent=1 // loop_pre_header
      _
    $region3: #{tpu_custom_call.1} parent=1 // loop_header
      %s14 = sphi 0, %s18
      %p15 = scmp.ge.s32.totalorder %s14, 11
      %s21 = sphi 0, %s33
      %s22 = sphi 0, %s29
      %s23 = sphi 0, %s21
      %s24 = sphi 0, %s22
      %s25 = sphi 0, %s23
      %s26 = sphi 0, %s24
      %s38 = sphi 0, %s40
      %s41 = sphi 0, %s38
      %s42 = sphi 0, %s41
      %s58 = sphi 0, %s42
      %s64 = sphi 0, %s66
      %s67 = sphi 0, %s64
      %s68 = sphi 0, %s67
      %s84 = sphi 0, %s68
      %s90 = sphi 0, %s92
      %s93 = sphi 0, %s90
      %s94 = sphi 0, %s93
      %s110 = sphi 0, %s94
    $region4: #{tpu_custom_call.1} parent=1 // loop_header_branch
      %17 = sbr.rel (%p15) target = $region8
    $region5: #{tpu_custom_call.1} parent=1 // loop_body
      %s19 = ssub.s32 %s14, 1
      %s20 = ssub.s32 %s14, 2
      %s27 = sadd.s32 1, %s22
      %p28 = scmp.ge.s32.totalorder %s27, 3
      %s29 = scalar_select %p28, 0, %s27
      %s30 = sadd.s32 1, %s21
      %s31 = scalar_select %p28, %s30, %s21
      %p32 = scmp.ge.s32.totalorder %s31, 3
      %s33 = scalar_select %p32, 0, %s31
      %s34 = ssub.s32 %s21, %s33
      %s35 = ssub.s32 %s22, %s29
      %s36 = sor.u32 %s34, %s35
      %p37 = scmp.eq.s32.totalorder %s36, 0
      %s39 = sadd.s32 %s38, 1
      %s40 = scalar_select %p37, %s38, %s39
      %p43 = pneg %p37
      %p44 = scmp.eq.s32.totalorder %s14, 8
      %p45 = por %p43, %p44
      %p46 = scmp.ne.s32.totalorder %s38, %s41
      %p47 = scmp.eq.s32.totalorder %s14, 0
      %p48 = por %p46, %p47
      %p49 = scmp.ne.s32.totalorder %s38, %s41
      %p50 = scmp.eq.s32.totalorder %s19, 8
      %p51 = por %p49, %p50
      %p52 = scmp.ne.s32.totalorder %s41, %s42
      %p53 = scmp.eq.s32.totalorder %s19, 0
      %p54 = por %p52, %p53
      %p55 = scmp.ne.s32.totalorder %s41, %s42
      %p56 = scmp.eq.s32.totalorder %s20, 8
      %p57 = por %p55, %p56
      %p59 = scmp.ne.s32.totalorder %s42, %s58
      %p60 = scmp.eq.s32.totalorder %s20, 0
      %p61 = por %p59, %p60
      %s62 = ssub.s32 %s21, %s33
      %p63 = scmp.eq.s32.totalorder %s62, 0
      %s65 = sadd.s32 %s64, 1
      %s66 = scalar_select %p63, %s64, %s65
      %p69 = pneg %p63
      %p70 = scmp.eq.s32.totalorder %s14, 8
      %p71 = por %p69, %p70
      %p72 = scmp.ne.s32.totalorder %s64, %s67
      %p73 = scmp.eq.s32.totalorder %s14, 0
      %p74 = por %p72, %p73
      %p75 = scmp.ne.s32.totalorder %s64, %s67
      %p76 = scmp.eq.s32.totalorder %s19, 8
      %p77 = por %p75, %p76
      %p78 = scmp.ne.s32.totalorder %s67, %s68
      %p79 = scmp.eq.s32.totalorder %s19, 0
      %p80 = por %p78, %p79
      %p81 = scmp.ne.s32.totalorder %s67, %s68
      %p82 = scmp.eq.s32.totalorder %s20, 8
      %p83 = por %p81, %p82
      %p85 = scmp.ne.s32.totalorder %s68, %s84
      %p86 = scmp.eq.s32.totalorder %s20, 0
      %p87 = por %p85, %p86
      %s88 = ssub.s32 %s21, %s33
      %p89 = scmp.eq.s32.totalorder %s88, 0
      %s91 = sadd.s32 %s90, 1
      %s92 = scalar_select %p89, %s90, %s91
      %p95 = pneg %p89
      %p96 = scmp.eq.s32.totalorder %s14, 8
      %p97 = por %p95, %p96
      %p98 = scmp.ne.s32.totalorder %s90, %s93
      %p99 = scmp.eq.s32.totalorder %s14, 0
      %p100 = por %p98, %p99
      %p101 = scmp.ne.s32.totalorder %s90, %s93
      %p102 = scmp.eq.s32.totalorder %s19, 8
      %p103 = por %p101, %p102
      %p104 = scmp.ne.s32.totalorder %s93, %s94
      %p105 = scmp.eq.s32.totalorder %s19, 0
      %p106 = por %p104, %p105
      %p107 = scmp.ne.s32.totalorder %s93, %s94
      %p108 = scmp.eq.s32.totalorder %s20, 8
      %p109 = por %p107, %p108
      %p111 = scmp.ne.s32.totalorder %s94, %s110
      %p112 = scmp.eq.s32.totalorder %s20, 0
      %p113 = por %p111, %p112
      %p114 = scmp.le.s32.totalorder 1, %s14
      %p115 = scmp.lt.s32.totalorder %s14, 10
      %p116 = pnand %p114, %p115
      %p117 = pneg %p116
      // Predicated region
      $region9: #{tpu_custom_call.1} parent=5 // pred_check
        _
      $region10: #{tpu_custom_call.1} parent=5 // pred_check_branch
        %119 = sbr.rel (%p116) target = $region12
      $region11: #{tpu_custom_call.1} parent=5 // pred_region
        %s120 = ssub.s32 %s14, 1
      $region12: #{tpu_custom_call.1} parent=5 // pred_fallthru
        _
      %p121 = scmp.lt.s32.totalorder %s14, 9
      // Predicated region
      $region13: #{tpu_custom_call.1} parent=5 // pred_check
        %p122 = pneg %p121
      $region14: #{tpu_custom_call.1} parent=5 // pred_check_branch
        %124 = sbr.rel (%p122) target = $region16
      $region15: #{tpu_custom_call.1} parent=5 // pred_region
        // Predicated region
        $region17: #{tpu_custom_call.1} parent=15 // pred_check
          %p125 = pneg %p48
        $region18: #{tpu_custom_call.1} parent=15 // pred_check_branch
          %127 = sbr.rel (%p125) target = $region20
        $region19: #{tpu_custom_call.1} parent=15 // pred_region
          %s128 = sand.u32 %s38, 1
          %s129 = scalar_lea.sflag [#allocation3], %s128
          %s130 = sand.u32 %s38, 1
          %s131 = smul.addr %s130, 8
          %s132 = scalar_lea.vmem [#allocation2], %s131
          %s134 = ssub.s32 128, 128
          %135 = vsyncadd %s129, %s134
          %s136 = smul.addr %s21, 3
          %s137 = sadd.s32 %s22, %s136
          %s138 = smul.addr %s137, 128
          %s139 = scalar_lea.hbm %s0, %s138
          %s141 = sshll.u32 %s132, 4
          %s142 = int_to_ptr.vmem [resolvable:$true] %s141
          %144 = dma.hbm_to_vmem [thread:$0]  %s139, 128, %s142, %s129
        $region20: #{tpu_custom_call.1} parent=15 // pred_fallthru
          _
        // Predicated region
        $region21: #{tpu_custom_call.1} parent=15 // pred_check
          %p145 = pneg %p74
        $region22: #{tpu_custom_call.1} parent=15 // pred_check_branch
          %147 = sbr.rel (%p145) target = $region24
        $region23: #{tpu_custom_call.1} parent=15 // pred_region
          %p148 = scmp.lt.s32.totalorder %s21, 2
          %s149 = scalar_select %p148, %s21, 2
          %s150 = smul.addr %s149, 8
          %s151 = scalar_lea.vmem %s1, %s150
        $region24: #{tpu_custom_call.1} parent=15 // pred_fallthru
          _
      $region16: #{tpu_custom_call.1} parent=5 // pred_fallthru
        _
      %p152 = scmp.le.s32.totalorder 1, %s14
      %p153 = scmp.lt.s32.totalorder %s14, 10
      %p154 = pnand %p152, %p153
      %p155 = pneg %p154
      // Predicated region
      $region25: #{tpu_custom_call.1} parent=5 // pred_check
        _
      $region26: #{tpu_custom_call.1} parent=5 // pred_check_branch
        %157 = sbr.rel (%p154) target = $region28
      $region27: #{tpu_custom_call.1} parent=5 // pred_region
        %s158 = ssub.s32 %s14, 1
        %s159 = sand.u32 %s41, 1
        %s160 = scalar_lea.sflag [#allocation3], %s159
        %s161 = sand.u32 %s41, 1
        %s162 = smul.addr %s161, 8
        %s163 = scalar_lea.vmem [#allocation2], %s162
        // Predicated region
        $region29: #{tpu_custom_call.1} parent=27 // pred_check
          %p164 = pneg %p54
        $region30: #{tpu_custom_call.1} parent=27 // pred_check_branch
          %166 = sbr.rel (%p164) target = $region32
        $region31: #{tpu_custom_call.1} parent=27 // pred_region
          %167 = dma.done %s160, 128
        $region32: #{tpu_custom_call.1} parent=27 // pred_fallthru
          _
        %s168 = sand.u32 %s41, 1
        %s169 = scalar_lea.sflag [#allocation3], %s168
        %s170 = sand.u32 %s41, 1
        %s171 = smul.addr %s170, 8
        %s172 = scalar_lea.vmem [#allocation2], %s171
        %p173 = pneg %p54
        %p174 = pneg %p51
        %p175 = scmp.lt.s32.totalorder %s23, 2
        %s176 = scalar_select %p175, %s23, 2
        %s177 = smul.addr %s176, 8
        %s178 = scalar_lea.vmem %s1, %s177
        %p179 = pneg %p80
        %p180 = pneg %p77
        %p181 = pneg %p106
        %p182 = pneg %p103
        %s183 = sand.u32 %s93, 1
        %s184 = scalar_lea.sflag [#allocation4], %s183
        %s185 = sand.u32 %s93, 1
        %s186 = smul.addr %s185, 8
        %s187 = scalar_lea.vmem [#allocation5], %s186
        %p188 = scmp.lt.s32.totalorder %s23, 2
        %s189 = scalar_select %p188, %s23, 2
        %s190 = smul.addr %s189, 8
        %s191 = scalar_lea.vmem %s1, %s190
        %p192 = scmp.eq.s32.totalorder %s24, 0
        // Predicated region
        $region33: #{tpu_custom_call.1} parent=27 // pred_check
          %p193 = pneg %p192
        $region34: #{tpu_custom_call.1} parent=27 // pred_check_branch
          %195 = sbr.rel (%p193) target = $region36
        $region35: #{tpu_custom_call.1} parent=27 // pred_region
          %196 = vst [vmem:[%s187] sm:$0xff] 0.0
        $region36: #{tpu_custom_call.1} parent=27 // pred_fallthru
          _
        %v197 = vld [vmem:[%s163] sm:$0xff]
        %v198 = vld [vmem:[%s191] sm:$0xff]
        %v199 = vlaneseq
        %v200 = vand.u32 %v199, 127
        %s201 = smul.u32 %s24, 128
        %s202 = ssub.s32 300, %s201
        %v203 = vstv %s202
        %vm204 = vcmp.lt.s32.totalorder %v200, %v203
        %v205 = vsel %vm204, %v197, 0.0
        %v206 = vstv %s201
        %v207 = vsub.s32 %v198, %v206
        %208 = vset.pattern.permute.xlu0 0
        %209 = vperm.xlu0 %208, %v207
        %v210 = vpop.permute.xlu0 %209
        %vm211 = vcmp.eq.s32.totalorder %v200, %v210
        %v212 = vsel %vm211, 0.6, 0.0013422819
        %vm213 = vcmp.ne.s32.totalorder %v198, 0
        %v214 = vmul.f32 %v212, %v205
        %215 = vadd.xlane.f32.xlu0 %v214
        %v216 = vpop.xlane.xlu0 %215
        %v217 = vsel %vm213, %v216, 0.0
        %v218 = vld [vmem:[%s187] sm:$0xff]
        %vm219 = vcmask 7168
        %v220 = vsel %vm219, %v217, 0.0
        %221 = vadd.xlane.f32.xlu0 %v220
        %v222 = vpop.xlane.xlu0 %221
        %v223 = vrot.slane %v222, 4
        %v224 = vadd.f32 %v222, %v223
        %v225 = vrot.slane %v224, 2
        %v226 = vadd.f32 %v224, %v225
        %v227 = vrot.slane %v226, 1
        %v228 = vadd.f32 %v226, %v227
        %s229 = vtos %v228
        %v230 = vstv %s229
        %v231 = vsub.f32 %v218, %v230
        %232 = vst [vmem:[%s187] sm:$0xff] %v231
        // Predicated region
        $region37: #{tpu_custom_call.1} parent=27 // pred_check
          %p233 = pneg %p192
        $region38: #{tpu_custom_call.1} parent=27 // pred_check_branch
          %235 = sbr.rel (%p233) target = $region40
        $region39: #{tpu_custom_call.1} parent=27 // pred_region
          %vm236 = vcmp.eq.s32.totalorder %v200, 0
          %v237 = vsel %vm213, 1, 0
          %238 = vset.pattern.permute.xlu0 0
          %239 = vperm.xlu0 %238, %v237
          %v240 = vpop.permute.xlu0 %239
          %vm241 = vcmp.eq.s32.totalorder %v240, 1
          %vm242 = vmand %vm236, %vm241
          %v243 = vsel %vm242, %v205, 0.0
          %244 = vadd.xlane.f32.xlu0 %v243
          %v245 = vpop.xlane.xlu0 %244
          %v246 = vrot.slane %v245, 4
          %v247 = vadd.f32 %v245, %v246
          %v248 = vrot.slane %v247, 2
          %v249 = vadd.f32 %v247, %v248
          %v250 = vrot.slane %v249, 1
          %v251 = vadd.f32 %v249, %v250
          %s252 = vtos %v251
          %v253 = vld [vmem:[%s187] sm:$0xff]
          %s254 = smul.f32 %s252, 0.0013422819
          %v255 = vstv %s254
          %v256 = vadd.f32 %v253, %v255
          %257 = vst [vmem:[%s187] sm:$0xff] %v256
        $region40: #{tpu_custom_call.1} parent=27 // pred_fallthru
          _
        %s258 = sand.u32 %s93, 1
        %s259 = scalar_lea.sflag [#allocation4], %s258
        %s260 = sand.u32 %s93, 1
        %s261 = smul.addr %s260, 8
        %s262 = scalar_lea.vmem [#allocation5], %s261
        // Predicated region
        $region41: #{tpu_custom_call.1} parent=27 // pred_check
          %p263 = pneg %p103
        $region42: #{tpu_custom_call.1} parent=27 // pred_check_branch
          %265 = sbr.rel (%p263) target = $region44
        $region43: #{tpu_custom_call.1} parent=27 // pred_region
          %s267 = ssub.s32 128, 128
          %268 = vsyncadd %s259, %s267
          %s269 = smul.addr %s23, 128
          %s270 = scalar_lea.hbm %s2, %s269
          %s272 = sshll.u32 %s262, 4
          %s273 = int_to_ptr.vmem [resolvable:$true] %s272
          %275 = dma.vmem_to_hbm [thread:$0]  %s273, 128, %s270, %s259
        $region44: #{tpu_custom_call.1} parent=27 // pred_fallthru
          _
      $region28: #{tpu_custom_call.1} parent=5 // pred_fallthru
        _
      %p276 = scmp.le.s32.totalorder 2, %s14
      // Predicated region
      $region45: #{tpu_custom_call.1} parent=5 // pred_check
        %p277 = pneg %p276
      $region46: #{tpu_custom_call.1} parent=5 // pred_check_branch
        %279 = sbr.rel (%p277) target = $region48
      $region47: #{tpu_custom_call.1} parent=5 // pred_region
        %s280 = ssub.s32 %s14, 2
        // Predicated region
        $region49: #{tpu_custom_call.1} parent=47 // pred_check
          %p281 = pneg %p109
        $region50: #{tpu_custom_call.1} parent=47 // pred_check_branch
          %283 = sbr.rel (%p281) target = $region52
        $region51: #{tpu_custom_call.1} parent=47 // pred_region
          %s284 = sand.u32 %s94, 1
          %s285 = scalar_lea.sflag [#allocation4], %s284
          %s286 = sand.u32 %s94, 1
          %s287 = smul.addr %s286, 8
          %s288 = scalar_lea.vmem [#allocation5], %s287
          %289 = dma.done %s285, 128
        $region52: #{tpu_custom_call.1} parent=47 // pred_fallthru
          _
      $region48: #{tpu_custom_call.1} parent=5 // pred_fallthru
        _
    $region6: #{tpu_custom_call.1} parent=1 // loop_footer
      %s18 = sadd.s32 1, %s14
    $region7: #{tpu_custom_call.1} parent=1 // loop_footer_branch
      %13 = sbr.rel target = $region3
    $region8: #{tpu_custom_call.1} parent=1 // loop_exit
      _
    %290 = vsyncpa [#allocation3], 1
    %s291 = scalar_lea.sflag [#allocation3], 1
    %292 = vsyncpa %s291, 1
    %293 = vsyncpa [#allocation4], 1
    %s294 = scalar_lea.sflag [#allocation4], 1
    %295 = vsyncpa %s294, 1

</llo_original>
